<compile_context>
chip_gen: v7x
topology: tpu7x:2x2x1
jax: 0.10.0
libtpu: 0.0.40
codegen_flags: <defaults>
</compile_context>

<pallas_src>
import jax
import jax.numpy as jnp
from jax import lax
from jax.experimental import pallas as pl
from jax.experimental.pallas import tpu as pltpu

NUM_CLASSES = 5          # real classes (torch: nn.Linear(input_size, 5))
C_PAD = 8                # padded to the f32 sublane multiple
_NEG_BIG = -1e30         # padded-class bias: never wins argmax, exp() underflows to 0


# -------------------- kernels --------------------

def _predict_kernel(xt_ref, w_ref, b_ref, out_ref):
    # logits^T[c, j] = sum_d W[c, d] * x[j, d] + b[c]          -> (C_PAD, B)
    logits = jnp.dot(w_ref[...], xt_ref[...],
                     preferred_element_type=jnp.float32) + b_ref[...]
    # argmax over classes (sublane axis). softmax is strictly monotonic -> dropped.
    cmax = jnp.max(logits, axis=0, keepdims=True)                       # (1, B)
    cls = lax.broadcasted_iota(jnp.int32, logits.shape, 0)              # class ids
    idx = jnp.min(jnp.where(logits >= cmax, cls, jnp.int32(C_PAD)),
                  axis=0, keepdims=True)                                # first max, (1, B)
    out_ref[...] = idx                                                  # lane-dense store


def _loss_kernel(xt_ref, w_ref, b_ref, y_ref, out_ref):
    # logits^T = W @ x^T + b                                    -> (C_PAD, B)
    logits = jnp.dot(w_ref[...], xt_ref[...],
                     preferred_element_type=jnp.float32) + b_ref[...]
    # per-sample cross entropy: logsumexp_c(logits) - logits[y]
    cmax = jnp.max(logits, axis=0, keepdims=True)                       # (1, B)
    lse = cmax + jnp.log(jnp.sum(jnp.exp(logits - cmax), axis=0, keepdims=True))
    cls = lax.broadcasted_iota(jnp.int32, logits.shape, 0)
    onehot = (cls == y_ref[...]).astype(jnp.float32)                    # y is (1, B), lane-major
    picked = jnp.sum(logits * onehot, axis=0, keepdims=True)            # (1, B)
    out_ref[...] = lse - picked                                         # per-sample CE, (1, B)


# -------------------- wrappers --------------------

_VMEM = pl.BlockSpec(memory_space=pltpu.MemorySpace.VMEM)   # whole array as one VMEM block


def prepare_params(w, b):
    """Pad torch-layout Linear params once: w (5, D) -> (8, D), b (5,) -> (8, 1)."""
    D = w.shape[1]
    w_pad = jnp.zeros((C_PAD, D), jnp.float32).at[:NUM_CLASSES, :].set(
        w.astype(jnp.float32))
    b_pad = jnp.full((C_PAD, 1), _NEG_BIG, jnp.float32).at[:NUM_CLASSES, 0].set(
        b.astype(jnp.float32))
    return w_pad, b_pad


def torch_model_forward(x, w_pad, b_pad, y=None):
    """x: (B, D) f32; w_pad/b_pad: from prepare_params; y: optional (B,) int labels."""
    B, D = x.shape
    xt = x.astype(jnp.float32).T                      # (D, B): batch on the lane axis

    if y is None:
        pred = pl.pallas_call(
            _predict_kernel,
            out_shape=jax.ShapeDtypeStruct((1, B), jnp.int32),
            in_specs=[_VMEM, _VMEM, _VMEM],
            out_specs=_VMEM,
        )(xt, w_pad, b_pad)
        return pred[0]                                 # (B,) predicted class indices

    y_row = y.astype(jnp.int32).reshape(1, B)          # lane-major labels
    losses = pl.pallas_call(
        _loss_kernel,
        out_shape=jax.ShapeDtypeStruct((1, B), jnp.float32),
        in_specs=[_VMEM, _VMEM, _VMEM, _VMEM],
        out_specs=_VMEM,
    )(xt, w_pad, b_pad, y_row)
    return jnp.mean(losses)                            # scalar mean CE (trivial 8-elem reduce)


# -------------------- reference (plain JAX) --------------------

def _ref_forward(x, w, b, y=None):
    logits = x @ w.T + b                               # torch layout: weight is (5, D)
    if y is None:
        probs = jax.nn.softmax(logits, axis=1)
        return jnp.argmax(probs, axis=1).astype(jnp.int32)
    lse = jax.nn.logsumexp(logits, axis=1)
    picked = jnp.take_along_axis(logits, y[:, None], axis=1)[:, 0]
    return jnp.mean(lse - picked)


# -------------------- main --------------------

if __name__ == "__main__":
    key = jax.random.PRNGKey(0)
    k_x, k_w, k_b, k_y = jax.random.split(key, 4)

    B, D = 8, 32                                       # batch=8, input_size=32
    x = jax.random.normal(k_x, (B, D), dtype=jnp.float32)
    w = jax.random.normal(k_w, (NUM_CLASSES, D), dtype=jnp.float32) * 0.1   # torch (5, D)
    b = jax.random.normal(k_b, (NUM_CLASSES,), dtype=jnp.float32) * 0.1
    y = jax.random.randint(k_y, (B,), 0, NUM_CLASSES, dtype=jnp.int32)

    w_pad, b_pad = prepare_params(w, b)                # pad once, outside the kernels

    # Inference path: predicted classes
    pred = jax.block_until_ready(torch_model_forward(x, w_pad, b_pad))
    pred_ref = _ref_forward(x, w, b)
    assert pred.shape == (B,)
    assert jnp.all(pred == pred_ref), (pred, pred_ref)

    # Training path: mean cross-entropy loss
    loss = jax.block_until_ready(torch_model_forward(x, w_pad, b_pad, y))
    loss_ref = _ref_forward(x, w, b, y)
    assert jnp.allclose(loss, loss_ref, rtol=1e-5, atol=1e-5), (loss, loss_ref)

    print("KERNEL_OK")
</pallas_src>

<mosaic_0001>
module attributes {stable_mosaic.version = 11 : i64} {
  func.func @_predict_kernel(%arg0: memref<32x8xf32, #tpu.memory_space<vmem>>, %arg1: memref<8x32xf32, #tpu.memory_space<vmem>>, %arg2: memref<8x1xf32, #tpu.memory_space<vmem>>, %arg3: memref<1x8xi32, #tpu.memory_space<vmem>>) attributes {dimension_semantics = [], scalar_prefetch = 0 : i64, scratch_operands = 0 : i64, tpu.core_type = #tpu.core_type<tc>} {
    %c0 = arith.constant 0 : index
    %c0_0 = arith.constant 0 : index
    %0 = vector.load %arg1[%c0, %c0_0] : memref<8x32xf32, #tpu.memory_space<vmem>>, vector<8x32xf32>
    %c0_1 = arith.constant 0 : index
    %c0_2 = arith.constant 0 : index
    %1 = vector.load %arg0[%c0_1, %c0_2] : memref<32x8xf32, #tpu.memory_space<vmem>>, vector<32x8xf32>
    %cst = arith.constant dense<0.000000e+00> : vector<8x8xf32>
    %2 = tpu.matmul %0, %1, %cst {dimension_numbers = #tpu.dot_dimension_numbers<[1], [0], [0], [1], [0, 0, 1, 1], [], []>} : vector<8x32xf32>, vector<32x8xf32>, vector<8x8xf32> -> vector<8x8xf32>
    %c0_3 = arith.constant 0 : index
    %c0_4 = arith.constant 0 : index
    %3 = vector.load %arg2[%c0_3, %c0_4] : memref<8x1xf32, #tpu.memory_space<vmem>>, vector<8x1xf32>
    %4 = vector.broadcast %3 : vector<8x1xf32> to vector<8x8xf32>
    %5 = arith.addf %2, %4 : vector<8x8xf32>
    %cst_5 = arith.constant dense<0xFF800000> : vector<8xf32>
    %6 = vector.multi_reduction <maximumf>, %5, %cst_5 [0] : vector<8x8xf32> to vector<8xf32>
    %7 = vector.shape_cast %6 : vector<8xf32> to vector<1x8xf32>
    %8 = tpu.iota {dimensions = array<i32: 0>} : vector<8x8xi32>
    %9 = vector.broadcast %7 : vector<1x8xf32> to vector<8x8xf32>
    %10 = arith.cmpf oge, %5, %9 : vector<8x8xf32>
    %c8_i32 = arith.constant 8 : i32
    %11 = vector.broadcast %c8_i32 : i32 to vector<8x8xi32>
    %12 = arith.select %10, %8, %11 : vector<8x8xi1>, vector<8x8xi32>
    %cst_6 = arith.constant dense<2147483647> : vector<8xi32>
    %13 = vector.multi_reduction <minsi>, %12, %cst_6 [0] : vector<8x8xi32> to vector<8xi32>
    %14 = vector.shape_cast %13 : vector<8xi32> to vector<1x8xi32>
    %c0_7 = arith.constant 0 : index
    %c0_8 = arith.constant 0 : index
    %15 = vector.load %arg3[%c0_7, %c0_8] : memref<1x8xi32, #tpu.memory_space<vmem>>, vector<1x8xi32>
    tpu.vector_store %arg3[%c0_7, %c0_8], %14 {strides = array<i32>} : memref<1x8xi32, #tpu.memory_space<vmem>>, vector<1x8xi32>,
    return
  }
}

</mosaic_0001>

<llo_original>
// kernel: tpu_custom_call.1
$region0: #{tpu_custom_call.1}
  #allocation0 [shape = 'u32[]', space=smem, size = 0x4, offset = 0x4, fixed_abs, tag = 'smem constant byte address 0x4 - core index']
  #allocation1 [shape = 'u32[144,128]{1,0:T(1,128)}', space=vmem, size = 0x12000, scoped, tag = 'internal scratch']
  %s0 = inlined_call_operand.vmem [shape: f32[32,8], index: 0, kind: input, shape index: {}]
  %s1 = inlined_call_operand.vmem [shape: f32[8,32], index: 1, kind: input, shape index: {}]
  %s2 = inlined_call_operand.vmem [shape: f32[8,1], index: 2, kind: input, shape index: {}]
  %s3 = inlined_call_operand.hbm [shape: s32[1,8], index: 3, kind: output, shape index: {}]
  %s4 = sld [smem:[#allocation0]]
  $region22: #{tpu_custom_call.1} parent=0
    _
  %s6 = ssub.s32 1, %s4
  %s7 = scalar_select 0, %s6, %s4
  $region1: #{tpu_custom_call.1} parent=0
    #allocation2 [shape = 'u8[512]{0}', space=vmem, size = 0x400, scoped, tag = 'output window, operand 0, single buffered']
    #allocation3 [shape = 's32[1]{0}', space=sflag, size = 0x4, scoped, tag = 'scoped memory for tpu_custom_call.1']
    %8 = vsyncpa [#allocation3], 0
    // Predicated region
    $region2: #{tpu_custom_call.1} parent=1 // pred_check
      _
    $region3: #{tpu_custom_call.1} parent=1 // pred_check_branch
      %10 = sbr.rel (0) target = $region5
    $region4: #{tpu_custom_call.1} parent=1 // pred_region
      _
    $region5: #{tpu_custom_call.1} parent=1 // pred_fallthru
      _
    // Predicated region
    $region6: #{tpu_custom_call.1} parent=1 // pred_check
      _
    $region7: #{tpu_custom_call.1} parent=1 // pred_check_branch
      %12 = sbr.rel (0) target = $region9
    $region8: #{tpu_custom_call.1} parent=1 // pred_region
      _
    $region9: #{tpu_custom_call.1} parent=1 // pred_fallthru
      _
    // Predicated region
    $region10: #{tpu_custom_call.1} parent=1 // pred_check
      _
    $region11: #{tpu_custom_call.1} parent=1 // pred_check_branch
      %14 = sbr.rel (0) target = $region13
    $region12: #{tpu_custom_call.1} parent=1 // pred_region
      _
    $region13: #{tpu_custom_call.1} parent=1 // pred_fallthru
      _
    %v15 = vld [vmem:[%s1] sm:$0xff]
    %v16 = vld [vmem:[%s0] sm:$0xff]
    %v17 = vld [vmem:[%s0 + $0x8] sm:$0xff]
    %v18 = vld [vmem:[%s0 + $0x10] sm:$0xff]
    %v19 = vld [vmem:[%s0 + $0x18] sm:$0xff]
    %v20 = vld [vmem:[%s2] sm:$0xff]
    %22 = vset.pattern.permute.xlu0 0
    %23 = vperm.xlu0 %22, %v20
    %v24 = vpop.permute.xlu0 %23
    %vm26 = vcmask 261120
    %v28 = vsel %vm26, %v15, 0
    %30 = vmatprep.subr.mxu0 0.0
    %31 = vmatpush1.msra.mxu0 %v16
    %32 = vmatprep.subr.mxu0 0.0
    %33 = vmatpush1.msra.mxu0 %v17
    %34 = vmatprep.subr.mxu0 0.0
    %35 = vmatpush1.msra.mxu0 %v18
    %36 = vmatprep.subr.mxu0 0.0
    %37 = vmatpush1.msra.mxu0 %v19
    %38 = vmatprep.subr.mxu0 0.0
    %39 = vmatpush1.msra.mxu0 0.0
    %40 = vmatprep.subr.mxu0 0.0
    %41 = vmatpush1.msra.mxu0 0.0
    %42 = vmatprep.subr.mxu0 0.0
    %43 = vmatpush1.msra.mxu0 0.0
    %44 = vmatprep.subr.mxu0 0.0
    %45 = vmatpush1.msra.mxu0 0.0
    %46 = vmatprep.subr.mxu0 0.0
    %47 = vmatpush1.msra.mxu0 0.0
    %48 = vmatprep.subr.mxu0 0.0
    %49 = vmatpush1.msra.mxu0 0.0
    %50 = vmatprep.subr.mxu0 0.0
    %51 = vmatpush1.msra.mxu0 0.0
    %52 = vmatprep.subr.mxu0 0.0
    %53 = vmatpush1.msra.mxu0 0.0
    %54 = vmatprep.subr.mxu0 0.0
    %55 = vmatpush1.msra.mxu0 0.0
    %56 = vmatprep.subr.mxu0 0.0
    %57 = vmatpush1.msra.mxu0 0.0
    %58 = vmatprep.subr.mxu0 0.0
    %59 = vmatpush1.msra.mxu0 0.0
    %60 = vmatprep.subr.mxu0 0.0
    %61 = vmatpush1.msra.mxu0 0.0
    %62 = vmatprep.subr.mxu0 0.0
    %63 = vmatpush1.msra.mxu0 0.0
    %64 = vmatprep.subr.mxu0 0.0
    %65 = vmatpush1.msra.mxu0 0.0
    %66 = vmatprep.subr.mxu0 0.0
    %67 = vmatpush1.msra.mxu0 0.0
    %68 = vmatprep.subr.mxu0 0.0
    %69 = vmatpush1.msra.mxu0 0.0
    %70 = vmatprep.subr.mxu0 0.0
    %71 = vmatpush1.msra.mxu0 0.0
    %72 = vmatprep.subr.mxu0 0.0
    %73 = vmatpush1.msra.mxu0 0.0
    %74 = vmatprep.subr.mxu0 0.0
    %75 = vmatpush1.msra.mxu0 0.0
    %76 = vmatprep.subr.mxu0 0.0
    %77 = vmatpush1.msra.mxu0 0.0
    %78 = vmatprep.subr.mxu0 0.0
    %79 = vmatpush1.msra.mxu0 0.0
    %80 = vmatprep.subr.mxu0 0.0
    %81 = vmatpush1.msra.mxu0 0.0
    %82 = vmatprep.subr.mxu0 0.0
    %83 = vmatpush1.msra.mxu0 0.0
    %84 = vmatprep.subr.mxu0 0.0
    %85 = vmatpush1.msra.mxu0 0.0
    %86 = vmatprep.subr.mxu0 0.0
    %87 = vmatpush1.msra.mxu0 0.0
    %88 = vmatprep.subr.mxu0 0.0
    %89 = vmatpush1.msra.mxu0 0.0
    %90 = vmatprep.subr.mxu0 0.0
    %91 = vmatpush1.msra.mxu0 0.0
    %92 = vmatprep.subr.mxu0 0.0
    %93 = vmatpush1.msra.mxu0 0.0
    %94 = vmatprep.mubr.f32.mxu0 0.0
    %95 = vmatmul.mubr.f32.gmra.mrb[0].mxu0 %v28
    %v96 = vpop.f32.mrb[0].mxu0
    %v97 = vadd.f32 %v24, %v96
    %v98 = vpop.f32.mrb[0].mxu0
    %99 = vdwg.mxu0
    %vm100 = vcmask 64512
    %v101 = vsel %vm100, %v97, -inf
    %v102 = vrot.slane %v101, 4
    %v103 = vmax.f32 %v101, %v102
    %v104 = vrot.slane %v103, 2
    %v105 = vmax.f32 %v103, %v104
    %v106 = vrot.slane %v105, 1
    %v107 = vmax.f32 %v105, %v106
    %v108 = vlaneseq
    %v109 = vshrl.u32 %v108, 7
    %vm110 = vcmp.ge.f32.partialorder %v97, %v107
    %v111 = vsel %vm110, %v109, 8
    %v112 = vsel %vm100, %v111, 2147483647
    %v113 = vrot.slane %v112, 4
    %vm114 = vcmp.lt.s32.totalorder %v112, %v113
    %v115 = vsel %vm114, %v112, %v113
    %v116 = vrot.slane %v115, 2
    %vm117 = vcmp.lt.s32.totalorder %v115, %v116
    %v118 = vsel %vm117, %v115, %v116
    %v119 = vrot.slane %v118, 1
    %vm120 = vcmp.lt.s32.totalorder %v118, %v119
    %v121 = vsel %vm120, %v118, %v119
    %vm122 = vcmask 57344
    %123 = vst.msk [vmem:[#allocation2] sm:$0x1] %vm122, %v121
    // Predicated region
    $region14: #{tpu_custom_call.1} parent=1 // pred_check
      _
    $region15: #{tpu_custom_call.1} parent=1 // pred_check_branch
      %125 = sbr.rel (0) target = $region17
    $region16: #{tpu_custom_call.1} parent=1 // pred_region
      %s127 = ssub.s32 16, 16
      %128 = vsyncadd [#allocation3], %s127
      %s130 = sshll.u32 [#allocation2], 4
      %s131 = int_to_ptr.vmem [resolvable:$true] %s130
      %133 = dma.vmem_to_hbm [thread:$0]  %s131, 16, %s3, [#allocation3]
    $region17: #{tpu_custom_call.1} parent=1 // pred_fallthru
      _
    // Predicated region
    $region18: #{tpu_custom_call.1} parent=1 // pred_check
      _
    $region19: #{tpu_custom_call.1} parent=1 // pred_check_branch
      %135 = sbr.rel (0) target = $region21
    $region20: #{tpu_custom_call.1} parent=1 // pred_region
      %136 = dma.done [#allocation3], 16
    $region21: #{tpu_custom_call.1} parent=1 // pred_fallthru
      _
    %137 = vsyncpa [#allocation3], 1

</llo_original>
